<compile_context>
chip_gen: v6e
topology: v6e:2x2x1
jax: 0.10.0
libtpu: 0.0.40
codegen_flags: <defaults>
</compile_context>

<pallas_src>
import functools

import jax
import jax.numpy as jnp
from jax.experimental import pallas as pl
from jax.experimental.pallas import tpu as pltpu

_LANE = 128      # vreg lane width
_SUBLANE = 8     # f32 sublane width


def _round_up(x, m):
    return ((x + m - 1) // m) * m


def _mlp_kernel(x_ref, w0_ref, b0_ref, w1_ref, b1_ref, o_ref):
    # linear_0: [tile_n, Dp_in] @ [Dp_in, Hp] + [1, Hp], then ReLU.
    h = jnp.dot(x_ref[...], w0_ref[...], preferred_element_type=jnp.float32)
    h = jnp.maximum(h + b0_ref[...], 0.0)
    # linear_1: [tile_n, Hp] @ [Hp, Dp_out] + [1, Dp_out].
    y = jnp.dot(h.astype(w1_ref.dtype), w1_ref[...],
                preferred_element_type=jnp.float32)
    o_ref[...] = (y + b1_ref[...]).astype(o_ref.dtype)


@functools.partial(jax.jit, static_argnames=("max_tile_n",))
def action_predictor_forward(x, w0, b0, w1, b1, *, max_tile_n=512):
    """x: [N, input_size] -> [N, output_size].

    Weights are stored as [in_features, out_features] (transposed relative to
    PyTorch's nn.Linear), biases as [1, features].  All feature dims are
    zero-padded to multiples of 128 and N to a multiple of the particle tile;
    padding is exact and is sliced off before returning.
    """
    n, d_in = x.shape
    hidden = w0.shape[1]
    d_out = w1.shape[1]
    dtype = x.dtype

    # Lane-dense (multiple-of-128) feature dims; full MXU / unmasked stores.
    d_in_p = _round_up(d_in, _LANE)
    hid_p = _round_up(hidden, _LANE)
    d_out_p = _round_up(d_out, _LANE)

    # Particle tiling: as big as possible (fewer grid steps), multiple of 8
    # sublanes, but never bigger than the (padded) problem itself.
    n_min = _round_up(n, _SUBLANE)
    tile_n = min(_round_up(max_tile_n, _SUBLANE), n_min)
    n_p = _round_up(n_min, tile_n)

    # Zero-pad inputs / parameters (exact: zero input cols x zero weight rows,
    # padded hidden units get bias 0 -> ReLU 0 -> contribute nothing).
    x_p = jnp.zeros((n_p, d_in_p), dtype).at[:n, :d_in].set(x)
    w0_p = jnp.zeros((d_in_p, hid_p), w0.dtype).at[:d_in, :hidden].set(w0)
    b0_p = jnp.zeros((1, hid_p), b0.dtype).at[:, :hidden].set(
        b0.reshape(1, hidden))
    w1_p = jnp.zeros((hid_p, d_out_p), w1.dtype).at[:hidden, :d_out].set(w1)
    b1_p = jnp.zeros((1, d_out_p), b1.dtype).at[:, :d_out].set(
        b1.reshape(1, d_out))

    grid = (n_p // tile_n,)
    out_p = pl.pallas_call(
        _mlp_kernel,
        out_shape=jax.ShapeDtypeStruct((n_p, d_out_p), dtype),
        grid_spec=pltpu.PrefetchScalarGridSpec(
            num_scalar_prefetch=0,
            grid=grid,
            in_specs=[
                pl.BlockSpec((tile_n, d_in_p), lambda i: (i, 0)),   # x tile
                pl.BlockSpec((d_in_p, hid_p), lambda i: (0, 0)),    # W0 (resident)
                pl.BlockSpec((1, hid_p), lambda i: (0, 0)),         # b0 (resident)
                pl.BlockSpec((hid_p, d_out_p), lambda i: (0, 0)),   # W1 (resident)
                pl.BlockSpec((1, d_out_p), lambda i: (0, 0)),       # b1 (resident)
            ],
            out_specs=pl.BlockSpec((tile_n, d_out_p), lambda i: (i, 0)),
        ),
        compiler_params=pltpu.CompilerParams(
            dimension_semantics=("parallel",)),
    )(x_p, w0_p, b0_p, w1_p, b1_p)

    # Strip padded rows / lanes.
    return out_p[:n, :d_out]


def init_action_predictor_params(key, input_size, hidden_size, output_size,
                                 dtype=jnp.float32):
    """Deterministic PyTorch-nn.Linear-style init (uniform +/- 1/sqrt(fan_in))."""
    k0, k1, k2, k3 = jax.random.split(key, 4)
    bound0 = 1.0 / jnp.sqrt(input_size)
    bound1 = 1.0 / jnp.sqrt(hidden_size)
    w0 = jax.random.uniform(k0, (input_size, hidden_size), dtype,
                            minval=-bound0, maxval=bound0)
    b0 = jax.random.uniform(k1, (1, hidden_size), dtype,
                            minval=-bound0, maxval=bound0)
    w1 = jax.random.uniform(k2, (hidden_size, output_size), dtype,
                            minval=-bound1, maxval=bound1)
    b1 = jax.random.uniform(k3, (1, output_size), dtype,
                            minval=-bound1, maxval=bound1)
    return w0, b0, w1, b1


if __name__ == "__main__":
    # Small shapes consistent with ActionPredictor(input_size, hidden, output).
    n_particles = 64
    input_size = 16
    hidden_size = 32
    output_size = 16

    key = jax.random.PRNGKey(0)
    kx, kp = jax.random.split(key)
    x = jax.random.normal(kx, (n_particles, input_size), jnp.float32)
    w0, b0, w1, b1 = init_action_predictor_params(
        kp, input_size, hidden_size, output_size)

    out = action_predictor_forward(x, w0, b0, w1, b1)
    out = jax.block_until_ready(out)

    # Pure-JAX reference (Linear -> ReLU -> Linear).
    ref = jnp.maximum(x @ w0 + b0, 0.0) @ w1 + b1
    assert out.shape == (n_particles, output_size)
    assert jnp.allclose(out, ref, atol=1e-5, rtol=1e-5)

    # Also exercise a non-multiple-of-8, multi-tile case to check padding/tiling.
    n2 = 1034
    x2 = jax.random.normal(jax.random.PRNGKey(1), (n2, input_size), jnp.float32)
    out2 = jax.block_until_ready(
        action_predictor_forward(x2, w0, b0, w1, b1, max_tile_n=512))
    ref2 = jnp.maximum(x2 @ w0 + b0, 0.0) @ w1 + b1
    assert out2.shape == (n2, output_size)
    assert jnp.allclose(out2, ref2, atol=1e-5, rtol=1e-5)

    print("KERNEL_OK")
</pallas_src>

<mosaic_0001>
module attributes {stable_mosaic.version = 11 : i64} {
  func.func @_mlp_kernel(%arg0: i32, %arg1: memref<64x128xf32, #tpu.memory_space<vmem>>, %arg2: memref<128x128xf32, #tpu.memory_space<vmem>>, %arg3: memref<1x128xf32, #tpu.memory_space<vmem>>, %arg4: memref<128x128xf32, #tpu.memory_space<vmem>>, %arg5: memref<1x128xf32, #tpu.memory_space<vmem>>, %arg6: memref<64x128xf32, #tpu.memory_space<vmem>>) attributes {dimension_semantics = [#tpu.dimension_semantics<parallel>], iteration_bounds = array<i64: 1>, scalar_prefetch = 0 : i64, scratch_operands = 0 : i64, tpu.core_type = #tpu.core_type<tc>, window_params = [{transform_indices = @transform_0, window_bounds = array<i64: 64, 128>}, {pipeline_mode = #tpu.pipeline_mode<synchronous>, transform_indices = @transform_1, window_bounds = array<i64: 128, 128>}, {pipeline_mode = #tpu.pipeline_mode<synchronous>, transform_indices = @transform_2, window_bounds = array<i64: 1, 128>}, {pipeline_mode = #tpu.pipeline_mode<synchronous>, transform_indices = @transform_3, window_bounds = array<i64: 128, 128>}, {pipeline_mode = #tpu.pipeline_mode<synchronous>, transform_indices = @transform_4, window_bounds = array<i64: 1, 128>}, {transform_indices = @transform_5, window_bounds = array<i64: 64, 128>}]} {
    %c0 = arith.constant 0 : index
    %c0_0 = arith.constant 0 : index
    %0 = vector.load %arg1[%c0, %c0_0] : memref<64x128xf32, #tpu.memory_space<vmem>>, vector<64x128xf32>
    %c0_1 = arith.constant 0 : index
    %c0_2 = arith.constant 0 : index
    %1 = vector.load %arg2[%c0_1, %c0_2] : memref<128x128xf32, #tpu.memory_space<vmem>>, vector<128x128xf32>
    %cst = arith.constant dense<0.000000e+00> : vector<64x128xf32>
    %2 = tpu.matmul %0, %1, %cst {dimension_numbers = #tpu.dot_dimension_numbers<[1], [0], [0], [1], [0, 0, 1, 1], [], []>} : vector<64x128xf32>, vector<128x128xf32>, vector<64x128xf32> -> vector<64x128xf32>
    %c0_3 = arith.constant 0 : index
    %c0_4 = arith.constant 0 : index
    %3 = vector.load %arg3[%c0_3, %c0_4] : memref<1x128xf32, #tpu.memory_space<vmem>>, vector<1x128xf32>
    %4 = vector.broadcast %3 : vector<1x128xf32> to vector<64x128xf32>
    %5 = arith.addf %2, %4 : vector<64x128xf32>
    %cst_5 = arith.constant 0.000000e+00 : f32
    %6 = vector.broadcast %cst_5 : f32 to vector<64x128xf32>
    %7 = arith.maximumf %5, %6 : vector<64x128xf32>
    %c0_6 = arith.constant 0 : index
    %c0_7 = arith.constant 0 : index
    %8 = vector.load %arg4[%c0_6, %c0_7] : memref<128x128xf32, #tpu.memory_space<vmem>>, vector<128x128xf32>
    %cst_8 = arith.constant dense<0.000000e+00> : vector<64x128xf32>
    %9 = tpu.matmul %7, %8, %cst_8 {dimension_numbers = #tpu.dot_dimension_numbers<[1], [0], [0], [1], [0, 0, 1, 1], [], []>} : vector<64x128xf32>, vector<128x128xf32>, vector<64x128xf32> -> vector<64x128xf32>
    %c0_9 = arith.constant 0 : index
    %c0_10 = arith.constant 0 : index
    %10 = vector.load %arg5[%c0_9, %c0_10] : memref<1x128xf32, #tpu.memory_space<vmem>>, vector<1x128xf32>
    %11 = vector.broadcast %10 : vector<1x128xf32> to vector<64x128xf32>
    %12 = arith.addf %9, %11 : vector<64x128xf32>
    %c0_11 = arith.constant 0 : index
    %c0_12 = arith.constant 0 : index
    %13 = vector.load %arg6[%c0_11, %c0_12] : memref<64x128xf32, #tpu.memory_space<vmem>>, vector<64x128xf32>
    tpu.vector_store %arg6[%c0_11, %c0_12], %12 {strides = array<i32>} : memref<64x128xf32, #tpu.memory_space<vmem>>, vector<64x128xf32>,
    return
  }
  func.func @transform_0(%arg0: i32) -> (i32, i32) {
    %c0_i32 = arith.constant 0 : i32
    %c0_i32_0 = arith.constant 0 : i32
    return %arg0, %c0_i32 : i32, i32
  }
  func.func @transform_1(%arg0: i32) -> (i32, i32) {
    %c0_i32 = arith.constant 0 : i32
    %c0_i32_0 = arith.constant 0 : i32
    %c0_i32_1 = arith.constant 0 : i32
    return %c0_i32, %c0_i32_0 : i32, i32
  }
  func.func @transform_2(%arg0: i32) -> (i32, i32) {
    %c0_i32 = arith.constant 0 : i32
    %c0_i32_0 = arith.constant 0 : i32
    %c0_i32_1 = arith.constant 0 : i32
    return %c0_i32, %c0_i32_0 : i32, i32
  }
  func.func @transform_3(%arg0: i32) -> (i32, i32) {
    %c0_i32 = arith.constant 0 : i32
    %c0_i32_0 = arith.constant 0 : i32
    %c0_i32_1 = arith.constant 0 : i32
    return %c0_i32, %c0_i32_0 : i32, i32
  }
  func.func @transform_4(%arg0: i32) -> (i32, i32) {
    %c0_i32 = arith.constant 0 : i32
    %c0_i32_0 = arith.constant 0 : i32
    %c0_i32_1 = arith.constant 0 : i32
    return %c0_i32, %c0_i32_0 : i32, i32
  }
  func.func @transform_5(%arg0: i32) -> (i32, i32) {
    %c0_i32 = arith.constant 0 : i32
    %c0_i32_0 = arith.constant 0 : i32
    return %arg0, %c0_i32 : i32, i32
  }
}

</mosaic_0001>

<llo_original>
// kernel: action_predictor_forward.1
$region0: #{action_predictor_forward.1}
  #allocation0 [shape = 'u32[]', space=smem, size = 0x4, offset = 0x4, fixed_abs, tag = 'smem constant byte address 0x4 - core index']
  #allocation1 [shape = 'u32[144,128]{1,0:T(1,128)}', space=vmem, size = 0x12000, scoped, tag = 'internal scratch']
  %s0 = inlined_call_operand.vmem [shape: f32[64,128], index: 0, kind: input, shape index: {}]
  %s1 = inlined_call_operand.vmem [shape: f32[128,128], index: 1, kind: input, shape index: {}]
  %s2 = inlined_call_operand.vmem [shape: f32[1,128], index: 2, kind: input, shape index: {}]
  %s3 = inlined_call_operand.vmem [shape: f32[128,128], index: 3, kind: input, shape index: {}]
  %s4 = inlined_call_operand.vmem [shape: f32[1,128], index: 4, kind: input, shape index: {}]
  %s5 = inlined_call_operand.vmem [shape: f32[64,128], index: 5, kind: output, shape index: {}]
  %s6 = sld [smem:[#allocation0]]
  $region30: #{action_predictor_forward.1} parent=0
    _
  %s8 = ssub.s32 1, %s6
  %s9 = scalar_select 0, %s8, %s6
  // Predicated region
  $region2: #{action_predictor_forward.1} parent=0 // pred_check
    _
  $region3: #{action_predictor_forward.1} parent=0 // pred_check_branch
    %11 = sbr.rel (0) target = $region5
  $region4: #{action_predictor_forward.1} parent=0 // pred_region
    _
  $region5: #{action_predictor_forward.1} parent=0 // pred_fallthru
    _
  // Predicated region
  $region6: #{action_predictor_forward.1} parent=0 // pred_check
    _
  $region7: #{action_predictor_forward.1} parent=0 // pred_check_branch
    %13 = sbr.rel (0) target = $region9
  $region8: #{action_predictor_forward.1} parent=0 // pred_region
    _
  $region9: #{action_predictor_forward.1} parent=0 // pred_fallthru
    _
  // Predicated region
  $region10: #{action_predictor_forward.1} parent=0 // pred_check
    _
  $region11: #{action_predictor_forward.1} parent=0 // pred_check_branch
    %15 = sbr.rel (0) target = $region13
  $region12: #{action_predictor_forward.1} parent=0 // pred_region
    _
  $region13: #{action_predictor_forward.1} parent=0 // pred_fallthru
    _
  // Predicated region
  $region14: #{action_predictor_forward.1} parent=0 // pred_check
    _
  $region15: #{action_predictor_forward.1} parent=0 // pred_check_branch
    %17 = sbr.rel (0) target = $region17
  $region16: #{action_predictor_forward.1} parent=0 // pred_region
    _
  $region17: #{action_predictor_forward.1} parent=0 // pred_fallthru
    _
  // Predicated region
  $region18: #{action_predictor_forward.1} parent=0 // pred_check
    _
  $region19: #{action_predictor_forward.1} parent=0 // pred_check_branch
    %19 = sbr.rel (0) target = $region21
  $region20: #{action_predictor_forward.1} parent=0 // pred_region
    _
  $region21: #{action_predictor_forward.1} parent=0 // pred_fallthru
    _
  %v20 = vld [vmem:[%s0] sm:$0xff]
  %v21 = vld [vmem:[%s0 + $0x8] sm:$0xff]
  %v22 = vld [vmem:[%s0 + $0x10] sm:$0xff]
  %v23 = vld [vmem:[%s0 + $0x18] sm:$0xff]
  %v24 = vld [vmem:[%s0 + $0x20] sm:$0xff]
  %v25 = vld [vmem:[%s0 + $0x28] sm:$0xff]
  %v26 = vld [vmem:[%s0 + $0x30] sm:$0xff]
  %v27 = vld [vmem:[%s0 + $0x38] sm:$0xff]
  %v28 = vld [vmem:[%s1] sm:$0xff]
  %v29 = vld [vmem:[%s1 + $0x8] sm:$0xff]
  %v30 = vld [vmem:[%s1 + $0x10] sm:$0xff]
  %v31 = vld [vmem:[%s1 + $0x18] sm:$0xff]
  %v32 = vld [vmem:[%s1 + $0x20] sm:$0xff]
  %v33 = vld [vmem:[%s1 + $0x28] sm:$0xff]
  %v34 = vld [vmem:[%s1 + $0x30] sm:$0xff]
  %v35 = vld [vmem:[%s1 + $0x38] sm:$0xff]
  %v36 = vld [vmem:[%s1 + $0x40] sm:$0xff]
  %v37 = vld [vmem:[%s1 + $0x48] sm:$0xff]
  %v38 = vld [vmem:[%s1 + $0x50] sm:$0xff]
  %v39 = vld [vmem:[%s1 + $0x58] sm:$0xff]
  %v40 = vld [vmem:[%s1 + $0x60] sm:$0xff]
  %v41 = vld [vmem:[%s1 + $0x68] sm:$0xff]
  %v42 = vld [vmem:[%s1 + $0x70] sm:$0xff]
  %v43 = vld [vmem:[%s1 + $0x78] sm:$0xff]
  %v44 = vld [vmem:[%s2] sm:$0x1]
  %v46 = vlaneseq
  %v47 = vshrl.u32 %v46, 7
  %v48 = vsub.s32 0, %v47
  %v49 = vrot.slane %v44, %v48
  %51 = vmatprep.subr.mxu0 0.0
  %52 = vmatpush1.msra.mxu0 %v43
  %53 = vmatprep.subr.mxu0 0.0
  %54 = vmatpush1.msra.mxu0 %v42
  %55 = vmatprep.subr.mxu0 0.0
  %56 = vmatpush1.msra.mxu0 %v41
  %57 = vmatprep.subr.mxu0 0.0
  %58 = vmatpush1.msra.mxu0 %v40
  %59 = vmatprep.subr.mxu0 0.0
  %60 = vmatpush1.msra.mxu0 %v39
  %61 = vmatprep.subr.mxu0 0.0
  %62 = vmatpush1.msra.mxu0 %v38
  %63 = vmatprep.subr.mxu0 0.0
  %64 = vmatpush1.msra.mxu0 %v37
  %65 = vmatprep.subr.mxu0 0.0
  %66 = vmatpush1.msra.mxu0 %v36
  %67 = vmatprep.subr.mxu0 0.0
  %68 = vmatpush1.msra.mxu0 %v35
  %69 = vmatprep.subr.mxu0 0.0
  %70 = vmatpush1.msra.mxu0 %v34
  %71 = vmatprep.subr.mxu0 0.0
  %72 = vmatpush1.msra.mxu0 %v33
  %73 = vmatprep.subr.mxu0 0.0
  %74 = vmatpush1.msra.mxu0 %v32
  %75 = vmatprep.subr.mxu0 0.0
  %76 = vmatpush1.msra.mxu0 %v31
  %77 = vmatprep.subr.mxu0 0.0
  %78 = vmatpush1.msra.mxu0 %v30
  %79 = vmatprep.subr.mxu0 0.0
  %80 = vmatpush1.msra.mxu0 %v29
  %81 = vmatprep.subr.mxu0 0.0
  %82 = vmatpush1.msra.mxu0 %v28
  %83 = vmatprep.subr.mxu0 0.0
  %84 = vmatpush2.msra.mxu0 0.0
  %85 = vmatprep.subr.mxu0 0.0
  %86 = vmatpush2.msra.mxu0 0.0
  %87 = vmatprep.subr.mxu0 0.0
  %88 = vmatpush2.msra.mxu0 0.0
  %89 = vmatprep.subr.mxu0 0.0
  %90 = vmatpush2.msra.mxu0 0.0
  %91 = vmatprep.subr.mxu0 0.0
  %92 = vmatpush2.msra.mxu0 0.0
  %93 = vmatprep.subr.mxu0 0.0
  %94 = vmatpush2.msra.mxu0 0.0
  %95 = vmatprep.subr.mxu0 0.0
  %96 = vmatpush2.msra.mxu0 0.0
  %97 = vmatprep.subr.mxu0 0.0
  %98 = vmatpush2.msra.mxu0 0.0
  %99 = vmatprep.subr.mxu0 0.0
  %100 = vmatpush2.msra.mxu0 0.0
  %101 = vmatprep.subr.mxu0 0.0
  %102 = vmatpush2.msra.mxu0 0.0
  %103 = vmatprep.subr.mxu0 0.0
  %104 = vmatpush2.msra.mxu0 0.0
  %105 = vmatprep.subr.mxu0 0.0
  %106 = vmatpush2.msra.mxu0 0.0
  %107 = vmatprep.subr.mxu0 0.0
  %108 = vmatpush2.msra.mxu0 0.0
  %109 = vmatprep.subr.mxu0 0.0
  %110 = vmatpush2.msra.mxu0 0.0
  %111 = vmatprep.subr.mxu0 0.0
  %112 = vmatpush2.msra.mxu0 0.0
  %113 = vmatprep.subr.mxu0 0.0
  %114 = vmatpush2.msra.mxu0 0.0
  %115 = vmatprep.mubr.f32.mxu0 0.0
  %116 = vmatmul.mubr.f32.gmra.mxu0 %v20
  %v117 = vpop.f32.mrf.mxu0
  %v118 = vadd.f32 %v49, %v117
  %v119 = vpop.f32.mrf.mxu0
  %120 = vmatprep.mubr.f32.mxu0 0.0
  %121 = vmatmul.mubr.f32.gmra.mxu0 %v21
  %v122 = vpop.f32.mrf.mxu0
  %v123 = vadd.f32 %v49, %v122
  %v124 = vpop.f32.mrf.mxu0
  %125 = vmatprep.mubr.f32.mxu0 0.0
  %126 = vmatmul.mubr.f32.gmra.mxu0 %v22
  %v127 = vpop.f32.mrf.mxu0
  %v128 = vadd.f32 %v49, %v127
  %v129 = vpop.f32.mrf.mxu0
  %130 = vmatprep.mubr.f32.mxu0 0.0
  %131 = vmatmul.mubr.f32.gmra.mxu0 %v23
  %v132 = vpop.f32.mrf.mxu0
  %v133 = vadd.f32 %v49, %v132
  %v134 = vpop.f32.mrf.mxu0
  %135 = vmatprep.mubr.f32.mxu0 0.0
  %136 = vmatmul.mubr.f32.gmra.mxu0 %v24
  %v137 = vpop.f32.mrf.mxu0
  %v138 = vadd.f32 %v49, %v137
  %v139 = vpop.f32.mrf.mxu0
  %140 = vmatprep.mubr.f32.mxu0 0.0
  %141 = vmatmul.mubr.f32.gmra.mxu0 %v25
  %v142 = vpop.f32.mrf.mxu0
  %v143 = vadd.f32 %v49, %v142
  %v144 = vpop.f32.mrf.mxu0
  %145 = vmatprep.mubr.f32.mxu0 0.0
  %146 = vmatmul.mubr.f32.gmra.mxu0 %v26
  %v147 = vpop.f32.mrf.mxu0
  %v148 = vadd.f32 %v49, %v147
  %v149 = vpop.f32.mrf.mxu0
  %150 = vmatprep.mubr.f32.mxu0 0.0
  %151 = vmatmul.mubr.f32.gmra.mxu0 %v27
  %v152 = vpop.f32.mrf.mxu0
  %v153 = vadd.f32 %v49, %v152
  %v154 = vpop.f32.mrf.mxu0
  %155 = vdwg.mxu0
  %v156 = vmax.f32 %v118, 0.0
  %v157 = vmax.f32 %v123, 0.0
  %v158 = vmax.f32 %v128, 0.0
  %v159 = vmax.f32 %v133, 0.0
  %v160 = vmax.f32 %v138, 0.0
  %v161 = vmax.f32 %v143, 0.0
  %v162 = vmax.f32 %v148, 0.0
  %v163 = vmax.f32 %v153, 0.0
  %v164 = vld [vmem:[%s3] sm:$0xff]
  %v165 = vld [vmem:[%s3 + $0x8] sm:$0xff]
  %v166 = vld [vmem:[%s3 + $0x10] sm:$0xff]
  %v167 = vld [vmem:[%s3 + $0x18] sm:$0xff]
  %v168 = vld [vmem:[%s3 + $0x20] sm:$0xff]
  %v169 = vld [vmem:[%s3 + $0x28] sm:$0xff]
  %v170 = vld [vmem:[%s3 + $0x30] sm:$0xff]
  %v171 = vld [vmem:[%s3 + $0x38] sm:$0xff]
  %v172 = vld [vmem:[%s3 + $0x40] sm:$0xff]
  %v173 = vld [vmem:[%s3 + $0x48] sm:$0xff]
  %v174 = vld [vmem:[%s3 + $0x50] sm:$0xff]
  %v175 = vld [vmem:[%s3 + $0x58] sm:$0xff]
  %v176 = vld [vmem:[%s3 + $0x60] sm:$0xff]
  %v177 = vld [vmem:[%s3 + $0x68] sm:$0xff]
  %v178 = vld [vmem:[%s3 + $0x70] sm:$0xff]
  %v179 = vld [vmem:[%s3 + $0x78] sm:$0xff]
  %v180 = vld [vmem:[%s4] sm:$0x1]
  %v182 = vlaneseq
  %v183 = vshrl.u32 %v182, 7
  %v184 = vsub.s32 0, %v183
  %v185 = vrot.slane %v180, %v184
  %187 = vmatprep.subr.mxu0 0.0
  %188 = vmatpush1.msra.mxu0 %v179
  %189 = vmatprep.subr.mxu0 0.0
  %190 = vmatpush1.msra.mxu0 %v178
  %191 = vmatprep.subr.mxu0 0.0
  %192 = vmatpush1.msra.mxu0 %v177
  %193 = vmatprep.subr.mxu0 0.0
  %194 = vmatpush1.msra.mxu0 %v176
  %195 = vmatprep.subr.mxu0 0.0
  %196 = vmatpush1.msra.mxu0 %v175
  %197 = vmatprep.subr.mxu0 0.0
  %198 = vmatpush1.msra.mxu0 %v174
  %199 = vmatprep.subr.mxu0 0.0
  %200 = vmatpush1.msra.mxu0 %v173
  %201 = vmatprep.subr.mxu0 0.0
  %202 = vmatpush1.msra.mxu0 %v172
  %203 = vmatprep.subr.mxu0 0.0
  %204 = vmatpush1.msra.mxu0 %v171
  %205 = vmatprep.subr.mxu0 0.0
  %206 = vmatpush1.msra.mxu0 %v170
  %207 = vmatprep.subr.mxu0 0.0
  %208 = vmatpush1.msra.mxu0 %v169
  %209 = vmatprep.subr.mxu0 0.0
  %210 = vmatpush1.msra.mxu0 %v168
  %211 = vmatprep.subr.mxu0 0.0
  %212 = vmatpush1.msra.mxu0 %v167
  %213 = vmatprep.subr.mxu0 0.0
  %214 = vmatpush1.msra.mxu0 %v166
  %215 = vmatprep.subr.mxu0 0.0
  %216 = vmatpush1.msra.mxu0 %v165
  %217 = vmatprep.subr.mxu0 0.0
  %218 = vmatpush1.msra.mxu0 %v164
  %219 = vmatprep.subr.mxu0 0.0
  %220 = vmatpush2.msra.mxu0 0.0
  %221 = vmatprep.subr.mxu0 0.0
  %222 = vmatpush2.msra.mxu0 0.0
  %223 = vmatprep.subr.mxu0 0.0
  %224 = vmatpush2.msra.mxu0 0.0
  %225 = vmatprep.subr.mxu0 0.0
  %226 = vmatpush2.msra.mxu0 0.0
  %227 = vmatprep.subr.mxu0 0.0
  %228 = vmatpush2.msra.mxu0 0.0
  %229 = vmatprep.subr.mxu0 0.0
  %230 = vmatpush2.msra.mxu0 0.0
  %231 = vmatprep.subr.mxu0 0.0
  %232 = vmatpush2.msra.mxu0 0.0
  %233 = vmatprep.subr.mxu0 0.0
  %234 = vmatpush2.msra.mxu0 0.0
  %235 = vmatprep.subr.mxu0 0.0
  %236 = vmatpush2.msra.mxu0 0.0
  %237 = vmatprep.subr.mxu0 0.0
  %238 = vmatpush2.msra.mxu0 0.0
  %239 = vmatprep.subr.mxu0 0.0
  %240 = vmatpush2.msra.mxu0 0.0
  %241 = vmatprep.subr.mxu0 0.0
  %242 = vmatpush2.msra.mxu0 0.0
  %243 = vmatprep.subr.mxu0 0.0
  %244 = vmatpush2.msra.mxu0 0.0
  %245 = vmatprep.subr.mxu0 0.0
  %246 = vmatpush2.msra.mxu0 0.0
  %247 = vmatprep.subr.mxu0 0.0
  %248 = vmatpush2.msra.mxu0 0.0
  %249 = vmatprep.subr.mxu0 0.0
  %250 = vmatpush2.msra.mxu0 0.0
  %251 = vmatprep.mubr.f32.mxu0 0.0
  %252 = vmatmul.mubr.f32.gmra.mxu0 %v156
  %v253 = vpop.f32.mrf.mxu0
  %v254 = vadd.f32 %v185, %v253
  %v255 = vpop.f32.mrf.mxu0
  %256 = vmatprep.mubr.f32.mxu0 0.0
  %257 = vmatmul.mubr.f32.gmra.mxu0 %v157
  %v258 = vpop.f32.mrf.mxu0
  %v259 = vadd.f32 %v185, %v258
  %v260 = vpop.f32.mrf.mxu0
  %261 = vmatprep.mubr.f32.mxu0 0.0
  %262 = vmatmul.mubr.f32.gmra.mxu0 %v158
  %v263 = vpop.f32.mrf.mxu0
  %v264 = vadd.f32 %v185, %v263
  %v265 = vpop.f32.mrf.mxu0
  %266 = vmatprep.mubr.f32.mxu0 0.0
  %267 = vmatmul.mubr.f32.gmra.mxu0 %v159
  %v268 = vpop.f32.mrf.mxu0
  %v269 = vadd.f32 %v185, %v268
  %v270 = vpop.f32.mrf.mxu0
  %271 = vmatprep.mubr.f32.mxu0 0.0
  %272 = vmatmul.mubr.f32.gmra.mxu0 %v160
  %v273 = vpop.f32.mrf.mxu0
  %v274 = vadd.f32 %v185, %v273
  %v275 = vpop.f32.mrf.mxu0
  %276 = vmatprep.mubr.f32.mxu0 0.0
  %277 = vmatmul.mubr.f32.gmra.mxu0 %v161
  %v278 = vpop.f32.mrf.mxu0
  %v279 = vadd.f32 %v185, %v278
  %v280 = vpop.f32.mrf.mxu0
  %281 = vmatprep.mubr.f32.mxu0 0.0
  %282 = vmatmul.mubr.f32.gmra.mxu0 %v162
  %v283 = vpop.f32.mrf.mxu0
  %v284 = vadd.f32 %v185, %v283
  %v285 = vpop.f32.mrf.mxu0
  %286 = vmatprep.mubr.f32.mxu0 0.0
  %287 = vmatmul.mubr.f32.gmra.mxu0 %v163
  %v288 = vpop.f32.mrf.mxu0
  %v289 = vadd.f32 %v185, %v288
  %v290 = vpop.f32.mrf.mxu0
  %291 = vdwg.mxu0
  %292 = vst [vmem:[%s5] sm:$0xff] %v254
  %293 = vst [vmem:[%s5 + $0x8] sm:$0xff] %v259
  %294 = vst [vmem:[%s5 + $0x10] sm:$0xff] %v264
  %295 = vst [vmem:[%s5 + $0x18] sm:$0xff] %v269
  %296 = vst [vmem:[%s5 + $0x20] sm:$0xff] %v274
  %297 = vst [vmem:[%s5 + $0x28] sm:$0xff] %v279
  %298 = vst [vmem:[%s5 + $0x30] sm:$0xff] %v284
  %299 = vst [vmem:[%s5 + $0x38] sm:$0xff] %v289
  // Predicated region
  $region22: #{action_predictor_forward.1} parent=0 // pred_check
    _
  $region23: #{action_predictor_forward.1} parent=0 // pred_check_branch
    %301 = sbr.rel (0) target = $region25
  $region24: #{action_predictor_forward.1} parent=0 // pred_region
    _
  $region25: #{action_predictor_forward.1} parent=0 // pred_fallthru
    _
  // Predicated region
  $region26: #{action_predictor_forward.1} parent=0 // pred_check
    _
  $region27: #{action_predictor_forward.1} parent=0 // pred_check_branch
    %303 = sbr.rel (0) target = $region29
  $region28: #{action_predictor_forward.1} parent=0 // pred_region
    _
  $region29: #{action_predictor_forward.1} parent=0 // pred_fallthru
    _

</llo_original>
